<compile_context>
chip_gen: v5e
topology: v5e:2x2
jax: 0.10.0
libtpu: 0.0.40
codegen_flags: <defaults>
</compile_context>

<pallas_src>
import functools

import jax
import jax.numpy as jnp
from jax import lax
from jax.experimental import pallas as pl
from jax.experimental.pallas import tpu as pltpu


def _round_up(x, m):
    return (x + m - 1) // m * m


def _ffn_kernel(x_ref, w1_ref, b1_ref, w2_ref, b2_ref, o_ref):
    # x_ref: (TM, Cp); w1_ref/w2_ref: (Cp, Cp) in PyTorch (out, in) layout;
    # b1_ref/b2_ref: (1, Cp).
    x = x_ref[...]

    # y = x @ W^T without materializing a transpose: contract x's dim 1 with
    # the weight's dim 1 (its "in" dim). Native-dtype operands go straight to
    # the MXU; accumulate in f32.
    h = lax.dot_general(
        x, w1_ref[...],
        dimension_numbers=(((1,), (1,)), ((), ())),
        preferred_element_type=jnp.float32,
    )
    h = h + b1_ref[...].astype(jnp.float32)

    # Exact GELU (PyTorch nn.GELU default): 0.5 * x * (1 + erf(x / sqrt(2))).
    h = 0.5 * h * (1.0 + lax.erf(h * 0.7071067811865475))

    y = lax.dot_general(
        h.astype(w2_ref.dtype), w2_ref[...],
        dimension_numbers=(((1,), (1,)), ((), ())),
        preferred_element_type=jnp.float32,
    )
    y = y + b2_ref[...].astype(jnp.float32)

    o_ref[...] = y.astype(o_ref.dtype)


@functools.partial(jax.jit, static_argnames=("row_tile",))
def ffn_pallas(x, w1, b1, w2, b2, *, row_tile=None):
    """x: [B, S, C]; w1, w2: [C, C] (PyTorch layout: out x in); b1, b2: [C]."""
    B, S, C = x.shape
    N = B * S
    dtype = x.dtype

    # Sublane granularity for the row (second-to-last) dim.
    sub = 16 if dtype == jnp.bfloat16 else 8

    if row_tile is None:
        # Many-step grid => DMA/compute pipelining + megacore sharding.
        row_tile = 512 if N >= 512 else _round_up(N, sub)
    assert row_tile % sub == 0, "row_tile must be a multiple of the sublane tile"

    Np = _round_up(N, row_tile)
    Cp = _round_up(C, 128)  # lane-dense last dim

    x2 = x.reshape(N, C)
    if Np != N or Cp != C:
        x2 = jnp.pad(x2, ((0, Np - N), (0, Cp - C)))
    if Cp != C:
        w1 = jnp.pad(w1, ((0, Cp - C), (0, Cp - C)))
        w2 = jnp.pad(w2, ((0, Cp - C), (0, Cp - C)))
        b1 = jnp.pad(b1, (0, Cp - C))
        b2 = jnp.pad(b2, (0, Cp - C))
    b1r = b1.reshape(1, Cp)
    b2r = b2.reshape(1, Cp)

    grid = (Np // row_tile,)
    itemsize = jnp.dtype(dtype).itemsize
    cost = pl.CostEstimate(
        flops=2 * 2 * Np * Cp * Cp,              # two matmuls
        transcendentals=Np * Cp,                 # erf in GELU
        bytes_accessed=(2 * Np * Cp + 2 * Cp * Cp + 2 * Cp) * itemsize,
    )

    out = pl.pallas_call(
        _ffn_kernel,
        out_shape=jax.ShapeDtypeStruct((Np, Cp), dtype),
        grid_spec=pltpu.PrefetchScalarGridSpec(
            num_scalar_prefetch=0,
            grid=grid,
            in_specs=[
                pl.BlockSpec((row_tile, Cp), lambda i: (i, 0)),  # x rows (streamed)
                pl.BlockSpec((Cp, Cp), lambda i: (0, 0)),        # W1 (resident)
                pl.BlockSpec((1, Cp), lambda i: (0, 0)),         # b1
                pl.BlockSpec((Cp, Cp), lambda i: (0, 0)),        # W2 (resident)
                pl.BlockSpec((1, Cp), lambda i: (0, 0)),         # b2
            ],
            out_specs=pl.BlockSpec((row_tile, Cp), lambda i: (i, 0)),
        ),
        compiler_params=pltpu.CompilerParams(
            dimension_semantics=("parallel",),
            vmem_limit_bytes=64 * 1024 * 1024,
        ),
        cost_estimate=cost,
    )(x2, w1, b1r, w2, b2r)

    return out[:N, :C].reshape(B, S, C)


def ffn_reference(x, w1, b1, w2, b2):
    h = jnp.einsum("bsc,oc->bso", x, w1) + b1
    h = jax.nn.gelu(h, approximate=False)
    y = jnp.einsum("bsc,oc->bso", h, w2) + b2
    return y


if __name__ == "__main__":
    B, S, C = 2, 8, 32
    key = jax.random.PRNGKey(0)
    kx, kw1, kb1, kw2, kb2 = jax.random.split(key, 5)

    # Deterministic parameter init (PyTorch nn.Linear-style uniform bound).
    bound = 1.0 / (C ** 0.5)
    x = jax.random.normal(kx, (B, S, C), dtype=jnp.float32)
    w1 = jax.random.uniform(kw1, (C, C), minval=-bound, maxval=bound, dtype=jnp.float32)
    b1 = jax.random.uniform(kb1, (C,), minval=-bound, maxval=bound, dtype=jnp.float32)
    w2 = jax.random.uniform(kw2, (C, C), minval=-bound, maxval=bound, dtype=jnp.float32)
    b2 = jax.random.uniform(kb2, (C,), minval=-bound, maxval=bound, dtype=jnp.float32)

    out = ffn_pallas(x, w1, b1, w2, b2)
    out = jax.block_until_ready(out)

    ref = ffn_reference(x, w1, b1, w2, b2)
    assert out.shape == (B, S, C)
    assert jnp.allclose(out, ref, atol=1e-5, rtol=1e-5), "mismatch vs reference"

    print("KERNEL_OK")
</pallas_src>

<mosaic_0001>
module attributes {stable_mosaic.version = 11 : i64} {
  func.func @_ffn_kernel(%arg0: i32, %arg1: memref<16x128xf32, #tpu.memory_space<vmem>>, %arg2: memref<128x128xf32, #tpu.memory_space<vmem>>, %arg3: memref<1x128xf32, #tpu.memory_space<vmem>>, %arg4: memref<128x128xf32, #tpu.memory_space<vmem>>, %arg5: memref<1x128xf32, #tpu.memory_space<vmem>>, %arg6: memref<16x128xf32, #tpu.memory_space<vmem>>) attributes {dimension_semantics = [#tpu.dimension_semantics<parallel>], iteration_bounds = array<i64: 1>, scalar_prefetch = 0 : i64, scratch_operands = 0 : i64, tpu.core_type = #tpu.core_type<tc>, window_params = [{transform_indices = @transform_0, window_bounds = array<i64: 16, 128>}, {pipeline_mode = #tpu.pipeline_mode<synchronous>, transform_indices = @transform_1, window_bounds = array<i64: 128, 128>}, {pipeline_mode = #tpu.pipeline_mode<synchronous>, transform_indices = @transform_2, window_bounds = array<i64: 1, 128>}, {pipeline_mode = #tpu.pipeline_mode<synchronous>, transform_indices = @transform_3, window_bounds = array<i64: 128, 128>}, {pipeline_mode = #tpu.pipeline_mode<synchronous>, transform_indices = @transform_4, window_bounds = array<i64: 1, 128>}, {transform_indices = @transform_5, window_bounds = array<i64: 16, 128>}]} {
    %c0 = arith.constant 0 : index
    %c0_0 = arith.constant 0 : index
    %0 = vector.load %arg1[%c0, %c0_0] : memref<16x128xf32, #tpu.memory_space<vmem>>, vector<16x128xf32>
    %c0_1 = arith.constant 0 : index
    %c0_2 = arith.constant 0 : index
    %1 = vector.load %arg2[%c0_1, %c0_2] : memref<128x128xf32, #tpu.memory_space<vmem>>, vector<128x128xf32>
    %cst = arith.constant dense<0.000000e+00> : vector<16x128xf32>
    %2 = tpu.matmul %0, %1, %cst {dimension_numbers = #tpu.dot_dimension_numbers<[1], [1], [0], [0], [0, 0, 1, 0], [], []>} : vector<16x128xf32>, vector<128x128xf32>, vector<16x128xf32> -> vector<16x128xf32>
    %c0_3 = arith.constant 0 : index
    %c0_4 = arith.constant 0 : index
    %3 = vector.load %arg3[%c0_3, %c0_4] : memref<1x128xf32, #tpu.memory_space<vmem>>, vector<1x128xf32>
    %4 = vector.broadcast %3 : vector<1x128xf32> to vector<16x128xf32>
    %5 = arith.addf %2, %4 : vector<16x128xf32>
    %cst_5 = arith.constant 5.000000e-01 : f32
    %6 = vector.broadcast %cst_5 : f32 to vector<16x128xf32>
    %7 = arith.mulf %6, %5 : vector<16x128xf32>
    %cst_6 = arith.constant 0.707106769 : f32
    %8 = vector.broadcast %cst_6 : f32 to vector<16x128xf32>
    %9 = arith.mulf %5, %8 : vector<16x128xf32>
    %10 = math.erf %9 : vector<16x128xf32>
    %cst_7 = arith.constant 1.000000e+00 : f32
    %11 = vector.broadcast %cst_7 : f32 to vector<16x128xf32>
    %12 = arith.addf %11, %10 : vector<16x128xf32>
    %13 = arith.mulf %7, %12 : vector<16x128xf32>
    %c0_8 = arith.constant 0 : index
    %c0_9 = arith.constant 0 : index
    %14 = vector.load %arg4[%c0_8, %c0_9] : memref<128x128xf32, #tpu.memory_space<vmem>>, vector<128x128xf32>
    %cst_10 = arith.constant dense<0.000000e+00> : vector<16x128xf32>
    %15 = tpu.matmul %13, %14, %cst_10 {dimension_numbers = #tpu.dot_dimension_numbers<[1], [1], [0], [0], [0, 0, 1, 0], [], []>} : vector<16x128xf32>, vector<128x128xf32>, vector<16x128xf32> -> vector<16x128xf32>
    %c0_11 = arith.constant 0 : index
    %c0_12 = arith.constant 0 : index
    %16 = vector.load %arg5[%c0_11, %c0_12] : memref<1x128xf32, #tpu.memory_space<vmem>>, vector<1x128xf32>
    %17 = vector.broadcast %16 : vector<1x128xf32> to vector<16x128xf32>
    %18 = arith.addf %15, %17 : vector<16x128xf32>
    %c0_13 = arith.constant 0 : index
    %c0_14 = arith.constant 0 : index
    %19 = vector.load %arg6[%c0_13, %c0_14] : memref<16x128xf32, #tpu.memory_space<vmem>>, vector<16x128xf32>
    tpu.vector_store %arg6[%c0_13, %c0_14], %18 {strides = array<i32>} : memref<16x128xf32, #tpu.memory_space<vmem>>, vector<16x128xf32>,
    return
  }
  func.func @transform_0(%arg0: i32) -> (i32, i32) {
    %c0_i32 = arith.constant 0 : i32
    %c0_i32_0 = arith.constant 0 : i32
    return %arg0, %c0_i32 : i32, i32
  }
  func.func @transform_1(%arg0: i32) -> (i32, i32) {
    %c0_i32 = arith.constant 0 : i32
    %c0_i32_0 = arith.constant 0 : i32
    %c0_i32_1 = arith.constant 0 : i32
    return %c0_i32, %c0_i32_0 : i32, i32
  }
  func.func @transform_2(%arg0: i32) -> (i32, i32) {
    %c0_i32 = arith.constant 0 : i32
    %c0_i32_0 = arith.constant 0 : i32
    %c0_i32_1 = arith.constant 0 : i32
    return %c0_i32, %c0_i32_0 : i32, i32
  }
  func.func @transform_3(%arg0: i32) -> (i32, i32) {
    %c0_i32 = arith.constant 0 : i32
    %c0_i32_0 = arith.constant 0 : i32
    %c0_i32_1 = arith.constant 0 : i32
    return %c0_i32, %c0_i32_0 : i32, i32
  }
  func.func @transform_4(%arg0: i32) -> (i32, i32) {
    %c0_i32 = arith.constant 0 : i32
    %c0_i32_0 = arith.constant 0 : i32
    %c0_i32_1 = arith.constant 0 : i32
    return %c0_i32, %c0_i32_0 : i32, i32
  }
  func.func @transform_5(%arg0: i32) -> (i32, i32) {
    %c0_i32 = arith.constant 0 : i32
    %c0_i32_0 = arith.constant 0 : i32
    return %arg0, %c0_i32 : i32, i32
  }
}

</mosaic_0001>

<llo_original>
// kernel: ffn_pallas.1
$region0: #{ffn_pallas.1}
  #allocation0 [shape = 'u32[]', space=smem, size = 0x4, offset = 0x4, fixed_abs, tag = 'smem constant byte address 0x4 - core index']
  #allocation1 [shape = 'u32[72,128]{1,0:T(1,128)}', space=vmem, size = 0x9000, scoped, tag = 'internal scratch']
  %s0 = inlined_call_operand.vmem [shape: f32[16,128], index: 0, kind: input, shape index: {}]
  %s1 = inlined_call_operand.vmem [shape: f32[128,128], index: 1, kind: input, shape index: {}]
  %s2 = inlined_call_operand.vmem [shape: f32[1,128], index: 2, kind: input, shape index: {}]
  %s3 = inlined_call_operand.vmem [shape: f32[128,128], index: 3, kind: input, shape index: {}]
  %s4 = inlined_call_operand.vmem [shape: f32[1,128], index: 4, kind: input, shape index: {}]
  %s5 = inlined_call_operand.vmem [shape: f32[16,128], index: 5, kind: output, shape index: {}]
  %s6 = sld [smem:[#allocation0]]
  $region30: #{ffn_pallas.1} parent=0
    _
  %s8 = ssub.s32 1, %s6
  %s9 = scalar_select 0, %s8, %s6
  // Predicated region
  $region2: #{ffn_pallas.1} parent=0 // pred_check
    _
  $region3: #{ffn_pallas.1} parent=0 // pred_check_branch
    %11 = sbr.rel (0) target = $region5
  $region4: #{ffn_pallas.1} parent=0 // pred_region
    _
  $region5: #{ffn_pallas.1} parent=0 // pred_fallthru
    _
  // Predicated region
  $region6: #{ffn_pallas.1} parent=0 // pred_check
    _
  $region7: #{ffn_pallas.1} parent=0 // pred_check_branch
    %13 = sbr.rel (0) target = $region9
  $region8: #{ffn_pallas.1} parent=0 // pred_region
    _
  $region9: #{ffn_pallas.1} parent=0 // pred_fallthru
    _
  // Predicated region
  $region10: #{ffn_pallas.1} parent=0 // pred_check
    _
  $region11: #{ffn_pallas.1} parent=0 // pred_check_branch
    %15 = sbr.rel (0) target = $region13
  $region12: #{ffn_pallas.1} parent=0 // pred_region
    _
  $region13: #{ffn_pallas.1} parent=0 // pred_fallthru
    _
  // Predicated region
  $region14: #{ffn_pallas.1} parent=0 // pred_check
    _
  $region15: #{ffn_pallas.1} parent=0 // pred_check_branch
    %17 = sbr.rel (0) target = $region17
  $region16: #{ffn_pallas.1} parent=0 // pred_region
    _
  $region17: #{ffn_pallas.1} parent=0 // pred_fallthru
    _
  // Predicated region
  $region18: #{ffn_pallas.1} parent=0 // pred_check
    _
  $region19: #{ffn_pallas.1} parent=0 // pred_check_branch
    %19 = sbr.rel (0) target = $region21
  $region20: #{ffn_pallas.1} parent=0 // pred_region
    _
  $region21: #{ffn_pallas.1} parent=0 // pred_fallthru
    _
  %v20 = vld [vmem:[%s0] sm:$0xff]
  %v21 = vld [vmem:[%s0 + $0x8] sm:$0xff]
  %v22 = vld [vmem:[%s1] sm:$0xff]
  %v23 = vld [vmem:[%s1 + $0x8] sm:$0xff]
  %v24 = vld [vmem:[%s1 + $0x10] sm:$0xff]
  %v25 = vld [vmem:[%s1 + $0x18] sm:$0xff]
  %v26 = vld [vmem:[%s1 + $0x20] sm:$0xff]
  %v27 = vld [vmem:[%s1 + $0x28] sm:$0xff]
  %v28 = vld [vmem:[%s1 + $0x30] sm:$0xff]
  %v29 = vld [vmem:[%s1 + $0x38] sm:$0xff]
  %v30 = vld [vmem:[%s1 + $0x40] sm:$0xff]
  %v31 = vld [vmem:[%s1 + $0x48] sm:$0xff]
  %v32 = vld [vmem:[%s1 + $0x50] sm:$0xff]
  %v33 = vld [vmem:[%s1 + $0x58] sm:$0xff]
  %v34 = vld [vmem:[%s1 + $0x60] sm:$0xff]
  %v35 = vld [vmem:[%s1 + $0x68] sm:$0xff]
  %v36 = vld [vmem:[%s1 + $0x70] sm:$0xff]
  %v37 = vld [vmem:[%s1 + $0x78] sm:$0xff]
  %v38 = vld [vmem:[%s2] sm:$0x1]
  %v40 = vperm.slane %v38, 0
  %42 = vmatpush.xpose.msra.mxu0 %v37
  %43 = vmatpush.xpose.msra.mxu0 %v36
  %44 = vmatpush.xpose.msra.mxu0 %v35
  %45 = vmatpush.xpose.msra.mxu0 %v34
  %46 = vmatpush.xpose.msra.mxu0 %v33
  %47 = vmatpush.xpose.msra.mxu0 %v32
  %48 = vmatpush.xpose.msra.mxu0 %v31
  %49 = vmatpush.xpose.msra.mxu0 %v30
  %50 = vmatpush.xpose.msra.mxu0 %v29
  %51 = vmatpush.xpose.msra.mxu0 %v28
  %52 = vmatpush.xpose.msra.mxu0 %v27
  %53 = vmatpush.xpose.msra.mxu0 %v26
  %54 = vmatpush.xpose.msra.mxu0 %v25
  %55 = vmatpush.xpose.msra.mxu0 %v24
  %56 = vmatpush.xpose.msra.mxu0 %v23
  %57 = vmatpush.xpose.msra.mxu0 %v22
  %58 = vmatmul.f32.gmra.mxu0 %v20
  %v59 = vpop.f32.mrf.mxu0
  %v60 = vadd.f32 %v40, %v59
  %61 = vmatmul.f32.gmra.mxu0 %v21
  %v62 = vpop.f32.mrf.mxu0
  %v63 = vadd.f32 %v40, %v62
  %64 = vdwg.mxu0
  %v65 = vmul.f32 %v60, 0.5
  %v66 = vmul.f32 %v63, 0.5
  %v67 = vmul.f32 %v60, 0.70710677
  %v68 = vmul.f32 %v63, 0.70710677
  %v69 = vmul.f32 %v67, %v67
  %v70 = vmin.f32 16.0, %v69
  %v71 = vmul.f32 %v70, 2.1237322e-06
  %v72 = vadd.f32 %v71, 0.00028619796
  %v73 = vmul.f32 %v70, %v72
  %v74 = vadd.f32 %v73, 0.0036580483
  %v75 = vmul.f32 %v70, %v74
  %v76 = vadd.f32 %v75, 0.05243302
  %v77 = vmul.f32 %v70, %v76
  %v78 = vadd.f32 %v77, 0.18741608
  %v79 = vmul.f32 %v70, %v78
  %v80 = vadd.f32 %v79, 1.1283791
  %v81 = vmul.f32 %v67, %v80
  %v82 = vmul.f32 %v70, 3.8918573e-05
  %v83 = vadd.f32 %v82, 0.001143296
  %v84 = vmul.f32 %v70, %v83
  %v85 = vadd.f32 %v84, 0.014752088
  %v86 = vmul.f32 %v70, %v85
  %v87 = vadd.f32 %v86, 0.112945676
  %v88 = vmul.f32 %v70, %v87
  %v89 = vadd.f32 %v88, 0.4994258
  %v90 = vmul.f32 %v70, %v89
  %v91 = vadd.f32 %v90, 1.0
  %v92 = vrcp.pop %v91
  %v93 = vmul.f32 %v91, %v92
  %v94 = vsub.f32 1.0, %v93
  %v95 = vmul.f32 %v92, %v94
  %v96 = vadd.f32 %v92, %v95
  %vm97 = vweird.f32 %v91
  %vm98 = vweird.f32 %v92
  %vm99 = vmor %vm97, %vm98
  %v100 = vsel %vm99, %v92, %v96
  %v101 = vand.u32 2147483647, %v91
  %vm102 = vcmp.eq.f32.partialorder %v101, 8.507059e+37
  %v103 = vand.u32 %v91, 2147483648
  %v104 = vor.u32 1.1754944e-38, %v103
  %v105 = vsel %vm102, %v104, %v100
  %v106 = vmul.f32 %v81, %v105
  %v107 = vmin.f32 %v106, 1.0
  %v108 = vmax.f32 %v107, -1.0
  %v109 = vmul.f32 %v68, %v68
  %v110 = vmin.f32 16.0, %v109
  %v111 = vmul.f32 %v110, 2.1237322e-06
  %v112 = vadd.f32 %v111, 0.00028619796
  %v113 = vmul.f32 %v110, %v112
  %v114 = vadd.f32 %v113, 0.0036580483
  %v115 = vmul.f32 %v110, %v114
  %v116 = vadd.f32 %v115, 0.05243302
  %v117 = vmul.f32 %v110, %v116
  %v118 = vadd.f32 %v117, 0.18741608
  %v119 = vmul.f32 %v110, %v118
  %v120 = vadd.f32 %v119, 1.1283791
  %v121 = vmul.f32 %v68, %v120
  %v122 = vmul.f32 %v110, 3.8918573e-05
  %v123 = vadd.f32 %v122, 0.001143296
  %v124 = vmul.f32 %v110, %v123
  %v125 = vadd.f32 %v124, 0.014752088
  %v126 = vmul.f32 %v110, %v125
  %v127 = vadd.f32 %v126, 0.112945676
  %v128 = vmul.f32 %v110, %v127
  %v129 = vadd.f32 %v128, 0.4994258
  %v130 = vmul.f32 %v110, %v129
  %v131 = vadd.f32 %v130, 1.0
  %v132 = vrcp.pop %v131
  %v133 = vmul.f32 %v131, %v132
  %v134 = vsub.f32 1.0, %v133
  %v135 = vmul.f32 %v132, %v134
  %v136 = vadd.f32 %v132, %v135
  %vm137 = vweird.f32 %v131
  %vm138 = vweird.f32 %v132
  %vm139 = vmor %vm137, %vm138
  %v140 = vsel %vm139, %v132, %v136
  %v141 = vand.u32 2147483647, %v131
  %vm142 = vcmp.eq.f32.partialorder %v141, 8.507059e+37
  %v143 = vand.u32 %v131, 2147483648
  %v144 = vor.u32 1.1754944e-38, %v143
  %v145 = vsel %vm142, %v144, %v140
  %v146 = vmul.f32 %v121, %v145
  %v147 = vmin.f32 %v146, 1.0
  %v148 = vmax.f32 %v147, -1.0
  %v149 = vadd.f32 %v108, 1.0
  %v150 = vadd.f32 %v148, 1.0
  %v151 = vmul.f32 %v65, %v149
  %v152 = vmul.f32 %v66, %v150
  %v153 = vld [vmem:[%s3] sm:$0xff]
  %v154 = vld [vmem:[%s3 + $0x8] sm:$0xff]
  %v155 = vld [vmem:[%s3 + $0x10] sm:$0xff]
  %v156 = vld [vmem:[%s3 + $0x18] sm:$0xff]
  %v157 = vld [vmem:[%s3 + $0x20] sm:$0xff]
  %v158 = vld [vmem:[%s3 + $0x28] sm:$0xff]
  %v159 = vld [vmem:[%s3 + $0x30] sm:$0xff]
  %v160 = vld [vmem:[%s3 + $0x38] sm:$0xff]
  %v161 = vld [vmem:[%s3 + $0x40] sm:$0xff]
  %v162 = vld [vmem:[%s3 + $0x48] sm:$0xff]
  %v163 = vld [vmem:[%s3 + $0x50] sm:$0xff]
  %v164 = vld [vmem:[%s3 + $0x58] sm:$0xff]
  %v165 = vld [vmem:[%s3 + $0x60] sm:$0xff]
  %v166 = vld [vmem:[%s3 + $0x68] sm:$0xff]
  %v167 = vld [vmem:[%s3 + $0x70] sm:$0xff]
  %v168 = vld [vmem:[%s3 + $0x78] sm:$0xff]
  %v169 = vld [vmem:[%s4] sm:$0x1]
  %v171 = vperm.slane %v169, 0
  %173 = vmatpush.xpose.msra.mxu0 %v168
  %174 = vmatpush.xpose.msra.mxu0 %v167
  %175 = vmatpush.xpose.msra.mxu0 %v166
  %176 = vmatpush.xpose.msra.mxu0 %v165
  %177 = vmatpush.xpose.msra.mxu0 %v164
  %178 = vmatpush.xpose.msra.mxu0 %v163
  %179 = vmatpush.xpose.msra.mxu0 %v162
  %180 = vmatpush.xpose.msra.mxu0 %v161
  %181 = vmatpush.xpose.msra.mxu0 %v160
  %182 = vmatpush.xpose.msra.mxu0 %v159
  %183 = vmatpush.xpose.msra.mxu0 %v158
  %184 = vmatpush.xpose.msra.mxu0 %v157
  %185 = vmatpush.xpose.msra.mxu0 %v156
  %186 = vmatpush.xpose.msra.mxu0 %v155
  %187 = vmatpush.xpose.msra.mxu0 %v154
  %188 = vmatpush.xpose.msra.mxu0 %v153
  %189 = vmatmul.f32.gmra.mxu0 %v151
  %v190 = vpop.f32.mrf.mxu0
  %v191 = vadd.f32 %v171, %v190
  %192 = vmatmul.f32.gmra.mxu0 %v152
  %v193 = vpop.f32.mrf.mxu0
  %v194 = vadd.f32 %v171, %v193
  %195 = vdwg.mxu0
  %196 = vst [vmem:[%s5] sm:$0xff] %v191
  %197 = vst [vmem:[%s5 + $0x8] sm:$0xff] %v194
  // Predicated region
  $region22: #{ffn_pallas.1} parent=0 // pred_check
    _
  $region23: #{ffn_pallas.1} parent=0 // pred_check_branch
    %199 = sbr.rel (0) target = $region25
  $region24: #{ffn_pallas.1} parent=0 // pred_region
    _
  $region25: #{ffn_pallas.1} parent=0 // pred_fallthru
    _
  // Predicated region
  $region26: #{ffn_pallas.1} parent=0 // pred_check
    _
  $region27: #{ffn_pallas.1} parent=0 // pred_check_branch
    %201 = sbr.rel (0) target = $region29
  $region28: #{ffn_pallas.1} parent=0 // pred_region
    _
  $region29: #{ffn_pallas.1} parent=0 // pred_fallthru
    _

</llo_original>
